<compile_context>
chip_gen: v7x
topology: tpu7x:2x2x1
jax: 0.10.0
libtpu: 0.0.40
codegen_flags: <defaults>
</compile_context>

<pallas_src>
import functools

import jax
import jax.numpy as jnp
import numpy as np
from jax.experimental import pallas as pl
from jax.experimental.pallas import tpu as pltpu


def _lstm_seq_kernel(num_layers, hidden,
                     hm_ref, state_in_ref, params_ref,
                     out_ref, state_out_ref,
                     state_scratch):
    """One grid step = one LSTMCombiner.forward call (batch=1, seq_len=1).

    Grid is (B, T): b indexes independent streams (parallel), t indexes sequential
    combiner calls within a stream (arbitrary; recurrent state carried in VMEM scratch).

      hm_ref        : (1, 1, 1, 2H)  concat(head, modifier) for this step
      state_in_ref  : (1, 1, 2LH)    initial packed state for stream b (fetched once per b)
      params_ref    : (P, 4H)        fused weight/bias slab (fetched once, VMEM resident)
      out_ref       : (1, 1, 1, H)   this step's output (top-layer h)
      state_out_ref : (1, 1, 2LH)    final packed state for stream b (written at t == T-1)
      state_scratch : (1, 2LH)       VMEM-resident recurrent state, carried across t

    params slab row layout (all static slices):
      rows [0, 3H)                       : layer-0 fused weights [w_ih.T ; w_hh.T]   (3H, 4H)
      rows [3H + 2H*(l-1), +2H)  l>=1    : layer-l fused weights [w_ih.T ; w_hh.T]   (2H, 4H)
      rows [3H + 2H*(L-1) + l]           : layer-l fused bias (b_ih + b_hh)          (1, 4H)
    """
    H = hidden
    L = num_layers
    t = pl.program_id(1)

    # New stream: load its initial packed state into the carried scratch.
    @pl.when(t == 0)
    def _():
        state_scratch[...] = state_in_ref[...].reshape(1, 2 * L * H)

    state = state_scratch[...]                              # (1, 2LH)
    x_below = hm_ref[...].reshape(1, 2 * H)                 # (1, 2H) = [head | modifier]

    bias_base = 3 * H + 2 * H * (L - 1)
    h_new, c_new = [], []
    for l in range(L):                                      # L is static -> fully unrolled
        h_prev = state[:, l * H:(l + 1) * H]                # (1, H)  lane slice
        c_prev = state[:, (L + l) * H:(L + l + 1) * H]      # (1, H)

        if l == 0:
            w = params_ref[0:3 * H, :]                      # (3H, 4H) static row slice
        else:
            base = 3 * H + 2 * H * (l - 1)
            w = params_ref[base:base + 2 * H, :]            # (2H, 4H)
        bias = params_ref[bias_base + l:bias_base + l + 1, :]   # (1, 4H)

        # Fused input row: [x_below | h_prev] -> one lane-dense MXU push per layer.
        x = jnp.concatenate([x_below, h_prev], axis=1)
        gates = jnp.dot(x, w, preferred_element_type=jnp.float32) + bias   # (1, 4H)

        # sigmoid(x) = 0.5*(tanh(x/2)+1): single EUP push over all 4H lanes.
        sig = 0.5 * (jnp.tanh(0.5 * gates) + 1.0)
        i = sig[:, 0 * H:1 * H]
        f = sig[:, 1 * H:2 * H]
        o = sig[:, 3 * H:4 * H]
        g = jnp.tanh(gates[:, 2 * H:3 * H])                 # tanh only on the g slice

        c = f * c_prev + i * g                              # (1, H)
        h = o * jnp.tanh(c)                                 # (1, H)
        h_new.append(h)
        c_new.append(c)
        x_below = h

    new_state = jnp.concatenate(h_new + c_new, axis=1)      # (1, 2LH) packed, lane dense
    state_scratch[...] = new_state
    out_ref[...] = x_below.reshape(1, 1, 1, H)              # top-layer hidden state

    # Only the last step of the stream needs to publish the final state.
    @pl.when(t == pl.num_programs(1) - 1)
    def _():
        state_out_ref[...] = new_state.reshape(1, 1, 2 * L * H)


def lstm_combiner_forward_seq(hm_seq, params_slab, state0):
    """Run T chained LSTMCombiner.forward calls for each of B independent streams.

    hm_seq : (B, T, 1, 2H)  concat(head, modifier) per step
    state0 : (B, 1, 2*L*H)  packed initial state per stream (aliased to the state output)
    returns (outputs (B, T, 1, H), final packed state (B, 1, 2*L*H))
    """
    B, T, _, twoH = hm_seq.shape
    H = twoH // 2
    twoLH = state0.shape[-1]
    L = twoLH // (2 * H)
    P = params_slab.shape[0]

    out_seq, state_out = pl.pallas_call(
        functools.partial(_lstm_seq_kernel, L, H),
        grid=(B, T),
        in_specs=[
            pl.BlockSpec((1, 1, 1, twoH), lambda b, t: (b, t, 0, 0)),   # per-step input
            pl.BlockSpec((1, 1, twoLH), lambda b, t: (b, 0, 0)),        # state: once per b
            pl.BlockSpec((P, 4 * H), lambda b, t: (0, 0)),              # weights: once, resident
        ],
        out_specs=[
            pl.BlockSpec((1, 1, 1, H), lambda b, t: (b, t, 0, 0)),
            pl.BlockSpec((1, 1, twoLH), lambda b, t: (b, 0, 0)),
        ],
        out_shape=[
            jax.ShapeDtypeStruct((B, T, 1, H), jnp.float32),
            jax.ShapeDtypeStruct((B, 1, twoLH), jnp.float32),
        ],
        scratch_shapes=[pltpu.VMEM((1, twoLH), jnp.float32)],
        input_output_aliases={1: 1},                        # packed state: in-place update
        compiler_params=pltpu.CompilerParams(
            dimension_semantics=("parallel", "arbitrary")),
    )(hm_seq, state0, params_slab)
    return out_seq, state_out


def lstm_combiner_forward(head_embed, modifier_embed, params_slab, state_packed):
    """Exactly LSTMCombiner.forward: one timestep, batch=1, seq_len=1.

    head_embed, modifier_embed: (1, H); state_packed: (1, 2*L*H).
    Returns (output (1, H), new packed state (1, 2*L*H)).
    """
    H = head_embed.shape[-1]
    hm = jnp.concatenate([head_embed.reshape(1, H), modifier_embed.reshape(1, H)], axis=1)
    out, state = lstm_combiner_forward_seq(
        hm.reshape(1, 1, 1, 2 * H), params_slab, state_packed.reshape(1, 1, -1))
    return out.reshape(1, H), state.reshape(1, -1)


def pack_state(h, c):
    """(L, H), (L, H) -> packed (1, 2*L*H) = [h_0..h_{L-1} | c_0..c_{L-1}]."""
    return jnp.concatenate([h.reshape(1, -1), c.reshape(1, -1)], axis=1)


def init_lstm_params(key, embedding_dim, num_layers):
    """PyTorch-style init: uniform(-1/sqrt(H), 1/sqrt(H)); PyTorch layout per layer."""
    H = embedding_dim
    bound = 1.0 / np.sqrt(H)
    keys = jax.random.split(key, num_layers * 4)
    params = []
    for l in range(num_layers):
        in_dim = 2 * H if l == 0 else H
        k0, k1, k2, k3 = keys[4 * l:4 * l + 4]
        w_ih = jax.random.uniform(k0, (4 * H, in_dim), jnp.float32, -bound, bound)
        w_hh = jax.random.uniform(k1, (4 * H, H), jnp.float32, -bound, bound)
        b_ih = jax.random.uniform(k2, (4 * H,), jnp.float32, -bound, bound)
        b_hh = jax.random.uniform(k3, (4 * H,), jnp.float32, -bound, bound)
        params.append((w_ih, w_hh, b_ih, b_hh))
    return params


def prepare_kernel_params(torch_params):
    """Fuse PyTorch-layout params into one pre-transposed lane-dense slab (P, 4H)."""
    L = len(torch_params)
    rows = []
    w_ih0, w_hh0, _, _ = torch_params[0]
    rows.append(jnp.concatenate([w_ih0.T, w_hh0.T], axis=0))            # (3H, 4H)
    for l in range(1, L):
        w_ih, w_hh, _, _ = torch_params[l]
        rows.append(jnp.concatenate([w_ih.T, w_hh.T], axis=0))          # (2H, 4H)
    for l in range(L):
        _, _, b_ih, b_hh = torch_params[l]
        rows.append((b_ih + b_hh)[None, :])                             # (1, 4H)
    return jnp.concatenate(rows, axis=0).astype(jnp.float32)            # (3H+2H(L-1)+L, 4H)


def reference_forward_seq(heads, mods, torch_params, h0, c0):
    """Pure-JAX reference: T chained LSTM steps (PyTorch gate order / layout)."""
    T = heads.shape[0]
    h, c = h0, c0
    outs = []
    for t in range(T):
        x = jnp.concatenate([heads[t:t + 1], mods[t:t + 1]], axis=1)
        new_h, new_c = [], []
        for l, (w_ih, w_hh, b_ih, b_hh) in enumerate(torch_params):
            H = w_hh.shape[1]
            gates = x @ w_ih.T + h[l:l + 1] @ w_hh.T + b_ih[None, :] + b_hh[None, :]
            i = jax.nn.sigmoid(gates[:, 0 * H:1 * H])
            f = jax.nn.sigmoid(gates[:, 1 * H:2 * H])
            g = jnp.tanh(gates[:, 2 * H:3 * H])
            o = jax.nn.sigmoid(gates[:, 3 * H:4 * H])
            cc = f * c[l:l + 1] + i * g
            hh = o * jnp.tanh(cc)
            new_h.append(hh)
            new_c.append(cc)
            x = hh
        h = jnp.concatenate(new_h, 0)
        c = jnp.concatenate(new_c, 0)
        outs.append(x)
    return jnp.concatenate(outs, 0), h, c


if __name__ == "__main__":
    embedding_dim = 32   # H
    num_layers = 2       # L
    B, T = 2, 8          # independent streams x chained combiner calls per stream

    key = jax.random.PRNGKey(0)
    k_params, k_head, k_mod = jax.random.split(key, 3)

    torch_params = init_lstm_params(k_params, embedding_dim, num_layers)
    params_slab = prepare_kernel_params(torch_params)

    H, L = embedding_dim, num_layers
    heads = jax.random.normal(k_head, (B, T, H), jnp.float32)
    mods = jax.random.normal(k_mod, (B, T, H), jnp.float32)
    hm_seq = jnp.concatenate([heads, mods], axis=-1).reshape(B, T, 1, 2 * H)

    # init_hidden(): zeros of (num_layers, 1, embedding_dim) -> packed (1, 2LH) per stream.
    h0 = jnp.zeros((L, H), jnp.float32)
    c0 = jnp.zeros((L, H), jnp.float32)
    state0 = jnp.tile(pack_state(h0, c0)[None, :, :], (B, 1, 1))         # (B, 1, 2LH)

    # Reference computed first (state0 given to the kernel is donated via aliasing).
    ref_out, ref_h, ref_c = [], [], []
    for b in range(B):
        o, hn, cn = reference_forward_seq(heads[b], mods[b], torch_params, h0, c0)
        ref_out.append(np.asarray(o)); ref_h.append(np.asarray(hn)); ref_c.append(np.asarray(cn))
    ref_out = np.stack(ref_out)   # (B, T, H)
    ref_h = np.stack(ref_h)       # (B, L, H)
    ref_c = np.stack(ref_c)       # (B, L, H)

    out_seq, state_out = lstm_combiner_forward_seq(hm_seq, params_slab, state0)
    out_seq = jax.block_until_ready(out_seq)
    state_out = jax.block_until_ready(state_out)

    out_np = np.asarray(out_seq).reshape(B, T, H)
    hn_np = np.asarray(state_out)[:, 0, :L * H].reshape(B, L, H)
    cn_np = np.asarray(state_out)[:, 0, L * H:].reshape(B, L, H)

    np.testing.assert_allclose(out_np, ref_out, rtol=1e-4, atol=2e-5)
    np.testing.assert_allclose(hn_np, ref_h, rtol=1e-4, atol=2e-5)
    np.testing.assert_allclose(cn_np, ref_c, rtol=1e-4, atol=2e-5)

    # Single-call path (exact LSTMCombiner.forward signature: batch=1, seq_len=1).
    single_out, single_state = lstm_combiner_forward(
        heads[0, 0:1], mods[0, 0:1], params_slab, pack_state(h0, c0))
    single_out = jax.block_until_ready(single_out)
    np.testing.assert_allclose(np.asarray(single_out), ref_out[0, 0:1], rtol=1e-4, atol=2e-5)
    assert single_out.shape == (1, embedding_dim)
    assert single_state.shape == (1, 2 * L * H)

    print("KERNEL_OK")
</pallas_src>

<mosaic_0001>
module attributes {stable_mosaic.version = 11 : i64} {
  func.func @_lstm_seq_kernel(%arg0: i32, %arg1: i32, %arg2: memref<1x1x1x64xf32, #tpu.memory_space<vmem>>, %arg3: memref<1x1x128xf32, #tpu.memory_space<vmem>>, %arg4: memref<162x128xf32, #tpu.memory_space<vmem>>, %arg5: memref<1x1x1x32xf32, #tpu.memory_space<vmem>>, %arg6: memref<1x1x128xf32, #tpu.memory_space<vmem>>, %arg7: memref<1x128xf32, #tpu.memory_space<vmem>>) attributes {dimension_semantics = [#tpu.dimension_semantics<parallel>, #tpu.dimension_semantics<arbitrary>], iteration_bounds = array<i64: 2, 8>, scalar_prefetch = 0 : i64, scratch_operands = 1 : i64, tpu.core_type = #tpu.core_type<tc>, window_params = [{transform_indices = @transform_0, window_bounds = array<i64: 1, 1, 1, 64>}, {transform_indices = @transform_1, window_bounds = array<i64: 1, 1, 128>}, {pipeline_mode = #tpu.pipeline_mode<synchronous>, transform_indices = @transform_2, window_bounds = array<i64: 162, 128>}, {transform_indices = @transform_3, window_bounds = array<i64: 1, 1, 1, 32>}, {transform_indices = @transform_4, window_bounds = array<i64: 1, 1, 128>}]} {
    %c0_i32 = arith.constant 0 : i32
    %0 = arith.cmpi eq, %arg1, %c0_i32 : i32
    %1 = arith.extui %0 : i1 to i32
    %c0_i32_0 = arith.constant 0 : i32
    %2 = arith.cmpi ne, %1, %c0_i32_0 : i32
    scf.if %2 {
      %c0_25 = arith.constant 0 : index
      %c0_26 = arith.constant 0 : index
      %c0_27 = arith.constant 0 : index
      %61 = vector.load %arg3[%c0_25, %c0_26, %c0_27] : memref<1x1x128xf32, #tpu.memory_space<vmem>>, vector<1x1x128xf32>
      %62 = vector.shape_cast %61 : vector<1x1x128xf32> to vector<1x128xf32>
      %c0_28 = arith.constant 0 : index
      %c0_29 = arith.constant 0 : index
      %63 = vector.load %arg7[%c0_28, %c0_29] : memref<1x128xf32, #tpu.memory_space<vmem>>, vector<1x128xf32>
      tpu.vector_store %arg7[%c0_28, %c0_29], %62 {strides = array<i32>} : memref<1x128xf32, #tpu.memory_space<vmem>>, vector<1x128xf32>,
    } else {
    }
    %c0 = arith.constant 0 : index
    %c0_1 = arith.constant 0 : index
    %3 = vector.load %arg7[%c0, %c0_1] : memref<1x128xf32, #tpu.memory_space<vmem>>, vector<1x128xf32>
    %c0_2 = arith.constant 0 : index
    %c0_3 = arith.constant 0 : index
    %c0_4 = arith.constant 0 : index
    %c0_5 = arith.constant 0 : index
    %4 = vector.load %arg2[%c0_2, %c0_3, %c0_4, %c0_5] : memref<1x1x1x64xf32, #tpu.memory_space<vmem>>, vector<1x1x1x64xf32>
    %5 = vector.shape_cast %4 : vector<1x1x1x64xf32> to vector<1x64xf32>
    %6 = vector.extract_strided_slice %3 {offsets = [0, 0], sizes = [1, 32], strides = [1, 1]} : vector<1x128xf32> to vector<1x32xf32>
    %7 = vector.extract_strided_slice %3 {offsets = [0, 64], sizes = [1, 32], strides = [1, 1]} : vector<1x128xf32> to vector<1x32xf32>
    %c0_6 = arith.constant 0 : index
    %c0_7 = arith.constant 0 : index
    %8 = vector.load %arg4[%c0_6, %c0_7] : memref<162x128xf32, #tpu.memory_space<vmem>>, vector<96x128xf32>
    %c160 = arith.constant 160 : index
    %c0_8 = arith.constant 0 : index
    %9 = vector.load %arg4[%c160, %c0_8] : memref<162x128xf32, #tpu.memory_space<vmem>>, vector<1x128xf32>
    %10 = tpu.concatenate %5, %6 in 1 : vector<1x64xf32>, vector<1x32xf32> -> vector<1x96xf32>
    %cst = arith.constant dense<0.000000e+00> : vector<1x128xf32>
    %11 = tpu.matmul %10, %8, %cst {dimension_numbers = #tpu.dot_dimension_numbers<[1], [0], [0], [1], [0, 0, 1, 1], [], []>} : vector<1x96xf32>, vector<96x128xf32>, vector<1x128xf32> -> vector<1x128xf32>
    %12 = arith.addf %11, %9 : vector<1x128xf32>
    %cst_9 = arith.constant 5.000000e-01 : f32
    %13 = vector.broadcast %cst_9 : f32 to vector<1x128xf32>
    %14 = arith.mulf %13, %12 : vector<1x128xf32>
    %15 = math.tanh %14 : vector<1x128xf32>
    %cst_10 = arith.constant 1.000000e+00 : f32
    %16 = vector.broadcast %cst_10 : f32 to vector<1x128xf32>
    %17 = arith.addf %15, %16 : vector<1x128xf32>
    %cst_11 = arith.constant 5.000000e-01 : f32
    %18 = vector.broadcast %cst_11 : f32 to vector<1x128xf32>
    %19 = arith.mulf %18, %17 : vector<1x128xf32>
    %20 = vector.extract_strided_slice %19 {offsets = [0, 0], sizes = [1, 32], strides = [1, 1]} : vector<1x128xf32> to vector<1x32xf32>
    %21 = vector.extract_strided_slice %19 {offsets = [0, 32], sizes = [1, 32], strides = [1, 1]} : vector<1x128xf32> to vector<1x32xf32>
    %22 = vector.extract_strided_slice %19 {offsets = [0, 96], sizes = [1, 32], strides = [1, 1]} : vector<1x128xf32> to vector<1x32xf32>
    %23 = vector.extract_strided_slice %12 {offsets = [0, 64], sizes = [1, 32], strides = [1, 1]} : vector<1x128xf32> to vector<1x32xf32>
    %24 = math.tanh %23 : vector<1x32xf32>
    %25 = arith.mulf %21, %7 : vector<1x32xf32>
    %26 = arith.mulf %20, %24 : vector<1x32xf32>
    %27 = arith.addf %25, %26 : vector<1x32xf32>
    %28 = math.tanh %27 : vector<1x32xf32>
    %29 = arith.mulf %22, %28 : vector<1x32xf32>
    %30 = vector.extract_strided_slice %3 {offsets = [0, 32], sizes = [1, 32], strides = [1, 1]} : vector<1x128xf32> to vector<1x32xf32>
    %31 = vector.extract_strided_slice %3 {offsets = [0, 96], sizes = [1, 32], strides = [1, 1]} : vector<1x128xf32> to vector<1x32xf32>
    %c96 = arith.constant 96 : index
    %c0_12 = arith.constant 0 : index
    %32 = vector.load %arg4[%c96, %c0_12] : memref<162x128xf32, #tpu.memory_space<vmem>>, vector<64x128xf32>
    %c161 = arith.constant 161 : index
    %c0_13 = arith.constant 0 : index
    %33 = vector.load %arg4[%c161, %c0_13] : memref<162x128xf32, #tpu.memory_space<vmem>>, vector<1x128xf32>
    %34 = tpu.concatenate %29, %30 in 1 : vector<1x32xf32>, vector<1x32xf32> -> vector<1x64xf32>
    %cst_14 = arith.constant dense<0.000000e+00> : vector<1x128xf32>
    %35 = tpu.matmul %34, %32, %cst_14 {dimension_numbers = #tpu.dot_dimension_numbers<[1], [0], [0], [1], [0, 0, 1, 1], [], []>} : vector<1x64xf32>, vector<64x128xf32>, vector<1x128xf32> -> vector<1x128xf32>
    %36 = arith.addf %35, %33 : vector<1x128xf32>
    %cst_15 = arith.constant 5.000000e-01 : f32
    %37 = vector.broadcast %cst_15 : f32 to vector<1x128xf32>
    %38 = arith.mulf %37, %36 : vector<1x128xf32>
    %39 = math.tanh %38 : vector<1x128xf32>
    %cst_16 = arith.constant 1.000000e+00 : f32
    %40 = vector.broadcast %cst_16 : f32 to vector<1x128xf32>
    %41 = arith.addf %39, %40 : vector<1x128xf32>
    %cst_17 = arith.constant 5.000000e-01 : f32
    %42 = vector.broadcast %cst_17 : f32 to vector<1x128xf32>
    %43 = arith.mulf %42, %41 : vector<1x128xf32>
    %44 = vector.extract_strided_slice %43 {offsets = [0, 0], sizes = [1, 32], strides = [1, 1]} : vector<1x128xf32> to vector<1x32xf32>
    %45 = vector.extract_strided_slice %43 {offsets = [0, 32], sizes = [1, 32], strides = [1, 1]} : vector<1x128xf32> to vector<1x32xf32>
    %46 = vector.extract_strided_slice %43 {offsets = [0, 96], sizes = [1, 32], strides = [1, 1]} : vector<1x128xf32> to vector<1x32xf32>
    %47 = vector.extract_strided_slice %36 {offsets = [0, 64], sizes = [1, 32], strides = [1, 1]} : vector<1x128xf32> to vector<1x32xf32>
    %48 = math.tanh %47 : vector<1x32xf32>
    %49 = arith.mulf %45, %31 : vector<1x32xf32>
    %50 = arith.mulf %44, %48 : vector<1x32xf32>
    %51 = arith.addf %49, %50 : vector<1x32xf32>
    %52 = math.tanh %51 : vector<1x32xf32>
    %53 = arith.mulf %46, %52 : vector<1x32xf32>
    %54 = tpu.concatenate %29, %53, %27, %51 in 1 : vector<1x32xf32>, vector<1x32xf32>, vector<1x32xf32>, vector<1x32xf32> -> vector<1x128xf32>
    %c0_18 = arith.constant 0 : index
    %c0_19 = arith.constant 0 : index
    %55 = vector.load %arg7[%c0_18, %c0_19] : memref<1x128xf32, #tpu.memory_space<vmem>>, vector<1x128xf32>
    tpu.vector_store %arg7[%c0_18, %c0_19], %54 {strides = array<i32>} : memref<1x128xf32, #tpu.memory_space<vmem>>, vector<1x128xf32>,
    %56 = vector.shape_cast %53 : vector<1x32xf32> to vector<1x1x1x32xf32>
    %c0_20 = arith.constant 0 : index
    %c0_21 = arith.constant 0 : index
    %c0_22 = arith.constant 0 : index
    %c0_23 = arith.constant 0 : index
    %57 = vector.load %arg5[%c0_20, %c0_21, %c0_22, %c0_23] : memref<1x1x1x32xf32, #tpu.memory_space<vmem>>, vector<1x1x1x32xf32>
    tpu.vector_store %arg5[%c0_20, %c0_21, %c0_22, %c0_23], %56 {strides = array<i32>} : memref<1x1x1x32xf32, #tpu.memory_space<vmem>>, vector<1x1x1x32xf32>,
    %c7_i32 = arith.constant 7 : i32
    %58 = arith.cmpi eq, %arg1, %c7_i32 : i32
    %59 = arith.extui %58 : i1 to i32
    %c0_i32_24 = arith.constant 0 : i32
    %60 = arith.cmpi ne, %59, %c0_i32_24 : i32
    scf.if %60 {
      %61 = vector.shape_cast %54 : vector<1x128xf32> to vector<1x1x128xf32>
      %c0_25 = arith.constant 0 : index
      %c0_26 = arith.constant 0 : index
      %c0_27 = arith.constant 0 : index
      %62 = vector.load %arg6[%c0_25, %c0_26, %c0_27] : memref<1x1x128xf32, #tpu.memory_space<vmem>>, vector<1x1x128xf32>
      tpu.vector_store %arg6[%c0_25, %c0_26, %c0_27], %61 {strides = array<i32>} : memref<1x1x128xf32, #tpu.memory_space<vmem>>, vector<1x1x128xf32>,
    } else {
    }
    return
  }
  func.func @transform_0(%arg0: i32, %arg1: i32) -> (i32, i32, i32, i32) {
    %c0_i32 = arith.constant 0 : i32
    %c0_i32_0 = arith.constant 0 : i32
    %c0_i32_1 = arith.constant 0 : i32
    return %arg0, %arg1, %c0_i32, %c0_i32_0 : i32, i32, i32, i32
  }
  func.func @transform_1(%arg0: i32, %arg1: i32) -> (i32, i32, i32) {
    %c0_i32 = arith.constant 0 : i32
    %c0_i32_0 = arith.constant 0 : i32
    %c0_i32_1 = arith.constant 0 : i32
    return %arg0, %c0_i32, %c0_i32_0 : i32, i32, i32
  }
  func.func @transform_2(%arg0: i32, %arg1: i32) -> (i32, i32) {
    %c0_i32 = arith.constant 0 : i32
    %c0_i32_0 = arith.constant 0 : i32
    %c0_i32_1 = arith.constant 0 : i32
    return %c0_i32, %c0_i32_0 : i32, i32
  }
  func.func @transform_3(%arg0: i32, %arg1: i32) -> (i32, i32, i32, i32) {
    %c0_i32 = arith.constant 0 : i32
    %c0_i32_0 = arith.constant 0 : i32
    %c0_i32_1 = arith.constant 0 : i32
    return %arg0, %arg1, %c0_i32, %c0_i32_0 : i32, i32, i32, i32
  }
  func.func @transform_4(%arg0: i32, %arg1: i32) -> (i32, i32, i32) {
    %c0_i32 = arith.constant 0 : i32
    %c0_i32_0 = arith.constant 0 : i32
    %c0_i32_1 = arith.constant 0 : i32
    return %arg0, %c0_i32, %c0_i32_0 : i32, i32, i32
  }
}

</mosaic_0001>

<llo_original>
// kernel: tpu_custom_call.1
$region0: #{tpu_custom_call.1}
  #allocation0 [shape = 'u32[]', space=smem, size = 0x4, offset = 0x4, fixed_abs, tag = 'smem constant byte address 0x4 - core index']
  #allocation1 [shape = 'u32[144,128]{1,0:T(1,128)}', space=vmem, size = 0x12000, scoped, tag = 'internal scratch']
  #allocation2 [shape = 'f32[1,128]{1,0:T(1,128)}', space=vmem, size = 0x200, scoped, tag = 'scratch operand']
  %s0 = inlined_call_operand.hbm [shape: f32[2,8,1,64], index: 0, kind: input, shape index: {}]
  %s1 = inlined_call_operand.hbm [shape: f32[2,1,128], index: 1, kind: input, shape index: {}, may-alias: {1,4}]
  %s2 = inlined_call_operand.hbm [shape: f32[162,128], index: 2, kind: input, shape index: {}]
  %s3 = inlined_call_operand.hbm [shape: f32[2,8,1,32], index: 3, kind: output, shape index: {0}]
  %s4 = inlined_call_operand.hbm [shape: f32[2,1,128], index: 4, kind: output, shape index: {1}, may-alias: {1,4}]
  %5 = xla_tuple %s3, %s4
  %s6 = sld [smem:[#allocation0]]
  $region73: #{tpu_custom_call.1} parent=0
    _
  %s8 = ssub.s32 1, %s6
  %s9 = scalar_select 0, %s8, %s6
  $region1: #{tpu_custom_call.1} parent=0
    #allocation3 [shape = 'u8[1024]{0}', space=vmem, size = 0x400, scoped, tag = 'input window, operand 0']
    #allocation4 [shape = 's32[2]{0}', space=sflag, size = 0x8, scoped, tag = 'scoped memory for tpu_custom_call.1']
    #allocation5 [shape = 's32[2]{0}', space=sflag, size = 0x8, scoped, tag = 'scoped memory for tpu_custom_call.1']
    #allocation6 [shape = 'u8[1024]{0}', space=vmem, size = 0x400, scoped, tag = 'input window, operand 1']
    #allocation7 [shape = 's32[2]{0}', space=sflag, size = 0x8, scoped, tag = 'scoped memory for tpu_custom_call.1']
    #allocation8 [shape = 'u8[86016]{0}', space=vmem, size = 0x15000, scoped, tag = 'input window, operand 2, single buffered']
    #allocation9 [shape = 'u8[1024]{0}', space=vmem, size = 0x400, scoped, tag = 'output window, operand 0']
    #allocation10 [shape = 'u8[1024]{0}', space=vmem, size = 0x400, scoped, tag = 'output window, operand 1']
    #allocation11 [shape = 's32[2]{0}', space=sflag, size = 0x8, scoped, tag = 'scoped memory for tpu_custom_call.1']
    %10 = vsyncpa [#allocation4], 0
    %s11 = scalar_lea.sflag [#allocation4], 1
    %12 = vsyncpa %s11, 0
    %13 = vsyncpa [#allocation7], 0
    %s14 = scalar_lea.sflag [#allocation7], 1
    %15 = vsyncpa %s14, 0
    %16 = vsyncpa [#allocation5], 0
    %s17 = scalar_lea.sflag [#allocation5], 1
    %18 = vsyncpa %s17, 0
    %19 = vsyncpa [#allocation11], 0
    %s20 = scalar_lea.sflag [#allocation11], 1
    %21 = vsyncpa %s20, 0
    loop: start=0, step=1, limit=18
    $region2: #{tpu_custom_call.1} parent=1 // loop_pre_header
      _
    $region3: #{tpu_custom_call.1} parent=1 // loop_header
      %s23 = sphi 0, %s27
      %p24 = scmp.ge.s32.totalorder %s23, 18
      %s30 = sphi 0, %s42
      %s31 = sphi 0, %s38
      %s32 = sphi 0, %s30
      %s33 = sphi 0, %s31
      %s34 = sphi 0, %s32
      %s35 = sphi 0, %s33
      %s47 = sphi 0, %s49
      %s50 = sphi 0, %s47
      %s51 = sphi 0, %s50
      %s67 = sphi 0, %s51
      %s73 = sphi 0, %s75
      %s76 = sphi 0, %s73
      %s77 = sphi 0, %s76
      %s93 = sphi 0, %s77
      %s97 = sphi 0, %s97
      %s99 = sphi 0, %s97
      %s100 = sphi 0, %s99
      %s114 = sphi 0, %s100
      %s122 = sphi 0, %s124
      %s125 = sphi 0, %s122
      %s126 = sphi 0, %s125
      %s142 = sphi 0, %s126
      %s148 = sphi 0, %s150
      %s151 = sphi 0, %s148
      %s152 = sphi 0, %s151
      %s168 = sphi 0, %s152
    $region4: #{tpu_custom_call.1} parent=1 // loop_header_branch
      %26 = sbr.rel (%p24) target = $region8
    $region5: #{tpu_custom_call.1} parent=1 // loop_body
      %s28 = ssub.s32 %s23, 1
      %s29 = ssub.s32 %s23, 2
      %s36 = sadd.s32 1, %s31
      %p37 = scmp.ge.s32.totalorder %s36, 8
      %s38 = scalar_select %p37, 0, %s36
      %s39 = sadd.s32 1, %s30
      %s40 = scalar_select %p37, %s39, %s30
      %p41 = scmp.ge.s32.totalorder %s40, 2
      %s42 = scalar_select %p41, 0, %s40
      %s43 = ssub.s32 %s30, %s42
      %s44 = ssub.s32 %s31, %s38
      %s45 = sor.u32 %s43, %s44
      %p46 = scmp.eq.s32.totalorder %s45, 0
      %s48 = sadd.s32 %s47, 1
      %s49 = scalar_select %p46, %s47, %s48
      %p52 = pneg %p46
      %p53 = scmp.eq.s32.totalorder %s23, 15
      %p54 = por %p52, %p53
      %p55 = scmp.ne.s32.totalorder %s47, %s50
      %p56 = scmp.eq.s32.totalorder %s23, 0
      %p57 = por %p55, %p56
      %p58 = scmp.ne.s32.totalorder %s47, %s50
      %p59 = scmp.eq.s32.totalorder %s28, 15
      %p60 = por %p58, %p59
      %p61 = scmp.ne.s32.totalorder %s50, %s51
      %p62 = scmp.eq.s32.totalorder %s28, 0
      %p63 = por %p61, %p62
      %p64 = scmp.ne.s32.totalorder %s50, %s51
      %p65 = scmp.eq.s32.totalorder %s29, 15
      %p66 = por %p64, %p65
      %p68 = scmp.ne.s32.totalorder %s51, %s67
      %p69 = scmp.eq.s32.totalorder %s29, 0
      %p70 = por %p68, %p69
      %s71 = ssub.s32 %s30, %s42
      %p72 = scmp.eq.s32.totalorder %s71, 0
      %s74 = sadd.s32 %s73, 1
      %s75 = scalar_select %p72, %s73, %s74
      %p78 = pneg %p72
      %p79 = scmp.eq.s32.totalorder %s23, 15
      %p80 = por %p78, %p79
      %p81 = scmp.ne.s32.totalorder %s73, %s76
      %p82 = scmp.eq.s32.totalorder %s23, 0
      %p83 = por %p81, %p82
      %p84 = scmp.ne.s32.totalorder %s73, %s76
      %p85 = scmp.eq.s32.totalorder %s28, 15
      %p86 = por %p84, %p85
      %p87 = scmp.ne.s32.totalorder %s76, %s77
      %p88 = scmp.eq.s32.totalorder %s28, 0
      %p89 = por %p87, %p88
      %p90 = scmp.ne.s32.totalorder %s76, %s77
      %p91 = scmp.eq.s32.totalorder %s29, 15
      %p92 = por %p90, %p91
      %p94 = scmp.ne.s32.totalorder %s77, %s93
      %p95 = scmp.eq.s32.totalorder %s29, 0
      %p96 = por %p94, %p95
      %s98 = sadd.s32 %s97, 1
      %p101 = scmp.eq.s32.totalorder %s23, 15
      %p102 = scmp.ne.s32.totalorder %s97, %s99
      %p103 = scmp.eq.s32.totalorder %s23, 0
      %p104 = por %p102, %p103
      %p105 = scmp.ne.s32.totalorder %s97, %s99
      %p106 = scmp.eq.s32.totalorder %s28, 15
      %p107 = por %p105, %p106
      %p108 = scmp.ne.s32.totalorder %s99, %s100
      %p109 = scmp.eq.s32.totalorder %s28, 0
      %p110 = por %p108, %p109
      %p111 = scmp.ne.s32.totalorder %s99, %s100
      %p112 = scmp.eq.s32.totalorder %s29, 15
      %p113 = por %p111, %p112
      %p115 = scmp.ne.s32.totalorder %s100, %s114
      %p116 = scmp.eq.s32.totalorder %s29, 0
      %p117 = por %p115, %p116
      %s118 = ssub.s32 %s30, %s42
      %s119 = ssub.s32 %s31, %s38
      %s120 = sor.u32 %s118, %s119
      %p121 = scmp.eq.s32.totalorder %s120, 0
      %s123 = sadd.s32 %s122, 1
      %s124 = scalar_select %p121, %s122, %s123
      %p127 = pneg %p121
      %p128 = scmp.eq.s32.totalorder %s23, 15
      %p129 = por %p127, %p128
      %p130 = scmp.ne.s32.totalorder %s122, %s125
      %p131 = scmp.eq.s32.totalorder %s23, 0
      %p132 = por %p130, %p131
      %p133 = scmp.ne.s32.totalorder %s122, %s125
      %p134 = scmp.eq.s32.totalorder %s28, 15
      %p135 = por %p133, %p134
      %p136 = scmp.ne.s32.totalorder %s125, %s126
      %p137 = scmp.eq.s32.totalorder %s28, 0
      %p138 = por %p136, %p137
      %p139 = scmp.ne.s32.totalorder %s125, %s126
      %p140 = scmp.eq.s32.totalorder %s29, 15
      %p141 = por %p139, %p140
      %p143 = scmp.ne.s32.totalorder %s126, %s142
      %p144 = scmp.eq.s32.totalorder %s29, 0
      %p145 = por %p143, %p144
      %s146 = ssub.s32 %s30, %s42
      %p147 = scmp.eq.s32.totalorder %s146, 0
      %s149 = sadd.s32 %s148, 1
      %s150 = scalar_select %p147, %s148, %s149
      %p153 = pneg %p147
      %p154 = scmp.eq.s32.totalorder %s23, 15
      %p155 = por %p153, %p154
      %p156 = scmp.ne.s32.totalorder %s148, %s151
      %p157 = scmp.eq.s32.totalorder %s23, 0
      %p158 = por %p156, %p157
      %p159 = scmp.ne.s32.totalorder %s148, %s151
      %p160 = scmp.eq.s32.totalorder %s28, 15
      %p161 = por %p159, %p160
      %p162 = scmp.ne.s32.totalorder %s151, %s152
      %p163 = scmp.eq.s32.totalorder %s28, 0
      %p164 = por %p162, %p163
      %p165 = scmp.ne.s32.totalorder %s151, %s152
      %p166 = scmp.eq.s32.totalorder %s29, 15
      %p167 = por %p165, %p166
      %p169 = scmp.ne.s32.totalorder %s152, %s168
      %p170 = scmp.eq.s32.totalorder %s29, 0
      %p171 = por %p169, %p170
      %p172 = scmp.le.s32.totalorder 1, %s23
      %p173 = scmp.lt.s32.totalorder %s23, 17
      %p174 = pnand %p172, %p173
      %p175 = pneg %p174
      // Predicated region
      $region9: #{tpu_custom_call.1} parent=5 // pred_check
        _
      $region10: #{tpu_custom_call.1} parent=5 // pred_check_branch
        %177 = sbr.rel (%p174) target = $region12
      $region11: #{tpu_custom_call.1} parent=5 // pred_region
        %s178 = ssub.s32 %s23, 1
        // Predicated region
        $region13: #{tpu_custom_call.1} parent=11 // pred_check
          %p179 = pneg %p110
        $region14: #{tpu_custom_call.1} parent=11 // pred_check_branch
          %181 = sbr.rel (%p179) target = $region16
        $region15: #{tpu_custom_call.1} parent=11 // pred_region
          %s183 = ssub.s32 2688, 2688
          %184 = vsyncadd [#allocation7], %s183
          %s185 = sshll.u32 [#allocation8], 4
          %s186 = int_to_ptr.vmem [resolvable:$true] %s185
          %191 = dma.hbm_to_vmem [thread:$0]  %s2, 2688, %s186, [#allocation7], 128, 128, 8
        $region16: #{tpu_custom_call.1} parent=11 // pred_fallthru
          _
      $region12: #{tpu_custom_call.1} parent=5 // pred_fallthru
        _
      %p192 = scmp.lt.s32.totalorder %s23, 16
      // Predicated region
      $region17: #{tpu_custom_call.1} parent=5 // pred_check
        %p193 = pneg %p192
      $region18: #{tpu_custom_call.1} parent=5 // pred_check_branch
        %195 = sbr.rel (%p193) target = $region20
      $region19: #{tpu_custom_call.1} parent=5 // pred_region
        // Predicated region
        $region21: #{tpu_custom_call.1} parent=19 // pred_check
          %p196 = pneg %p57
        $region22: #{tpu_custom_call.1} parent=19 // pred_check_branch
          %198 = sbr.rel (%p196) target = $region24
        $region23: #{tpu_custom_call.1} parent=19 // pred_region
          %s199 = sand.u32 %s47, 1
          %s200 = scalar_lea.sflag [#allocation4], %s199
          %s201 = sand.u32 %s47, 1
          %s202 = scalar_lea.vmem [#allocation3], %s201
          %s204 = ssub.s32 16, 16
          %205 = vsyncadd %s200, %s204
          %s206 = smul.addr %s30, 8
          %s207 = sadd.s32 %s31, %s206
          %s208 = smul.addr %s207, 16
          %s209 = scalar_lea.hbm %s0, %s208
          %s211 = sshll.u32 %s202, 4
          %s212 = int_to_ptr.vmem [resolvable:$true] %s211
          %214 = dma.hbm_to_vmem [thread:$0]  %s209, 16, %s212, %s200
        $region24: #{tpu_custom_call.1} parent=19 // pred_fallthru
          _
        // Predicated region
        $region25: #{tpu_custom_call.1} parent=19 // pred_check
          %p215 = pneg %p83
        $region26: #{tpu_custom_call.1} parent=19 // pred_check_branch
          %217 = sbr.rel (%p215) target = $region28
        $region27: #{tpu_custom_call.1} parent=19 // pred_region
          %s218 = sand.u32 %s23, 1
          %s219 = scalar_lea.sflag [#allocation7], %s218
          %s220 = sand.u32 %s73, 1
          %s221 = scalar_lea.vmem [#allocation6], %s220
          %s223 = ssub.s32 16, 16
          %224 = vsyncadd %s219, %s223
          %s225 = smul.addr %s30, 16
          %s226 = scalar_lea.hbm %s1, %s225
          %s228 = sshll.u32 %s221, 4
          %s229 = int_to_ptr.vmem [resolvable:$true] %s228
          %231 = dma.hbm_to_vmem [thread:$0]  %s226, 16, %s229, %s219
        $region28: #{tpu_custom_call.1} parent=19 // pred_fallthru
          _
      $region20: #{tpu_custom_call.1} parent=5 // pred_fallthru
        _
      %p232 = scmp.le.s32.totalorder 1, %s23
      %p233 = scmp.lt.s32.totalorder %s23, 17
      %p234 = pnand %p232, %p233
      %p235 = pneg %p234
      // Predicated region
      $region29: #{tpu_custom_call.1} parent=5 // pred_check
        _
      $region30: #{tpu_custom_call.1} parent=5 // pred_check_branch
        %237 = sbr.rel (%p234) target = $region32
      $region31: #{tpu_custom_call.1} parent=5 // pred_region
        %s238 = ssub.s32 %s23, 1
        %s239 = sand.u32 %s50, 1
        %s240 = scalar_lea.sflag [#allocation4], %s239
        %s241 = sand.u32 %s50, 1
        %s242 = scalar_lea.vmem [#allocation3], %s241
        // Predicated region
        $region33: #{tpu_custom_call.1} parent=31 // pred_check
          %p243 = pneg %p63
        $region34: #{tpu_custom_call.1} parent=31 // pred_check_branch
          %245 = sbr.rel (%p243) target = $region36
        $region35: #{tpu_custom_call.1} parent=31 // pred_region
          %246 = dma.done %s240, 16
        $region36: #{tpu_custom_call.1} parent=31 // pred_fallthru
          _
        %s247 = sand.u32 %s28, 1
        %s248 = scalar_lea.sflag [#allocation7], %s247
        %s249 = sand.u32 %s76, 1
        %s250 = scalar_lea.vmem [#allocation6], %s249
        // Predicated region
        $region37: #{tpu_custom_call.1} parent=31 // pred_check
          %p251 = pneg %p89
        $region38: #{tpu_custom_call.1} parent=31 // pred_check_branch
          %253 = sbr.rel (%p251) target = $region40
        $region39: #{tpu_custom_call.1} parent=31 // pred_region
          %254 = dma.done %s248, 16
        $region40: #{tpu_custom_call.1} parent=31 // pred_fallthru
          _
        // Predicated region
        $region41: #{tpu_custom_call.1} parent=31 // pred_check
          %p255 = pneg %p110
        $region42: #{tpu_custom_call.1} parent=31 // pred_check_branch
          %257 = sbr.rel (%p255) target = $region44
        $region43: #{tpu_custom_call.1} parent=31 // pred_region
          %258 = dma.done [#allocation7], 2688
        $region44: #{tpu_custom_call.1} parent=31 // pred_fallthru
          _
        %s259 = sand.u32 %s50, 1
        %s260 = scalar_lea.sflag [#allocation4], %s259
        %s261 = sand.u32 %s50, 1
        %s262 = scalar_lea.vmem [#allocation3], %s261
        %p263 = pneg %p63
        %p264 = pneg %p60
        %s265 = sand.u32 %s28, 1
        %s266 = scalar_lea.sflag [#allocation7], %s265
        %s267 = sand.u32 %s76, 1
        %s268 = scalar_lea.vmem [#allocation6], %s267
        %p269 = pneg %p89
        %p270 = pneg %p86
        %p271 = pneg %p110
        %p272 = pneg %p107
        %p273 = pneg %p138
        %p274 = pneg %p135
        %s275 = sand.u32 %s125, 1
        %s276 = scalar_lea.sflag [#allocation5], %s275
        %s277 = sand.u32 %s125, 1
        %s278 = scalar_lea.vmem [#allocation9], %s277
        %p279 = pneg %p164
        %p280 = pneg %p161
        %s281 = sand.u32 %s151, 1
        %s282 = scalar_lea.sflag [#allocation11], %s281
        %s283 = sand.u32 %s151, 1
        %s284 = scalar_lea.vmem [#allocation10], %s283
        %p285 = scmp.eq.s32.totalorder %s33, 0
        // Predicated region
        $region45: #{tpu_custom_call.1} parent=31 // pred_check
          %p286 = pneg %p285
        $region46: #{tpu_custom_call.1} parent=31 // pred_check_branch
          %288 = sbr.rel (%p286) target = $region48
        $region47: #{tpu_custom_call.1} parent=31 // pred_region
          %v289 = vld [vmem:[%s250] sm:$0x1]
          %290 = vst [vmem:[#allocation2] sm:$0x1] %v289
        $region48: #{tpu_custom_call.1} parent=31 // pred_fallthru
          _
        %v291 = vld [vmem:[#allocation2] sm:$0x1]
        %v292 = vld [vmem:[%s242] sm:$0x1]
        %v293 = vld [vmem:[#allocation8] sm:$0xff]
        %v294 = vld [vmem:[#allocation8 + $0x8] sm:$0xff]
        %v295 = vld [vmem:[#allocation8 + $0x10] sm:$0xff]
        %v296 = vld [vmem:[#allocation8 + $0x18] sm:$0xff]
        %v297 = vld [vmem:[#allocation8 + $0x20] sm:$0xff]
        %v298 = vld [vmem:[#allocation8 + $0x28] sm:$0xff]
        %v299 = vld [vmem:[#allocation8 + $0x30] sm:$0xff]
        %v300 = vld [vmem:[#allocation8 + $0x38] sm:$0xff]
        %v301 = vld [vmem:[#allocation8 + $0x40] sm:$0xff]
        %v302 = vld [vmem:[#allocation8 + $0x48] sm:$0xff]
        %v303 = vld [vmem:[#allocation8 + $0x50] sm:$0xff]
        %v304 = vld [vmem:[#allocation8 + $0x58] sm:$0xff]
        %v305 = vld [vmem:[#allocation8 + $0xa0] sm:$0x1]
        %v307 = vlaneseq
        %v308 = vshrl.u32 %v307, 7
        %v309 = vsub.s32 0, %v308
        %v310 = vrot.slane %v291, %v309
        %311 = vrot.lane.b32.xlu0 %v310, 64
        %v312 = vpop.permute.xlu0 %311
        %vm314 = vcmask 523264
        %v315 = vsel %vm314, %v292, %v312
        %vm316 = vcmask 785408
        %v318 = vsel %vm316, %v315, 0
        %320 = vmatprep.subr.mxu0 0.0
        %321 = vmatpush1.msra.mxu0 %v293
        %322 = vmatprep.subr.mxu0 0.0
        %323 = vmatpush1.msra.mxu0 %v294
        %324 = vmatprep.subr.mxu0 0.0
        %325 = vmatpush1.msra.mxu0 %v295
        %326 = vmatprep.subr.mxu0 0.0
        %327 = vmatpush1.msra.mxu0 %v296
        %328 = vmatprep.subr.mxu0 0.0
        %329 = vmatpush1.msra.mxu0 %v297
        %330 = vmatprep.subr.mxu0 0.0
        %331 = vmatpush1.msra.mxu0 %v298
        %332 = vmatprep.subr.mxu0 0.0
        %333 = vmatpush1.msra.mxu0 %v299
        %334 = vmatprep.subr.mxu0 0.0
        %335 = vmatpush1.msra.mxu0 %v300
        %336 = vmatprep.subr.mxu0 0.0
        %337 = vmatpush1.msra.mxu0 %v301
        %338 = vmatprep.subr.mxu0 0.0
        %339 = vmatpush1.msra.mxu0 %v302
        %340 = vmatprep.subr.mxu0 0.0
        %341 = vmatpush1.msra.mxu0 %v303
        %342 = vmatprep.subr.mxu0 0.0
        %343 = vmatpush1.msra.mxu0 %v304
        %344 = vmatprep.subr.mxu0 0.0
        %345 = vmatpush1.msra.mxu0 0.0
        %346 = vmatprep.subr.mxu0 0.0
        %347 = vmatpush1.msra.mxu0 0.0
        %348 = vmatprep.subr.mxu0 0.0
        %349 = vmatpush1.msra.mxu0 0.0
        %350 = vmatprep.subr.mxu0 0.0
        %351 = vmatpush1.msra.mxu0 0.0
        %352 = vmatprep.subr.mxu0 0.0
        %353 = vmatpush1.msra.mxu0 0.0
        %354 = vmatprep.subr.mxu0 0.0
        %355 = vmatpush1.msra.mxu0 0.0
        %356 = vmatprep.subr.mxu0 0.0
        %357 = vmatpush1.msra.mxu0 0.0
        %358 = vmatprep.subr.mxu0 0.0
        %359 = vmatpush1.msra.mxu0 0.0
        %360 = vmatprep.subr.mxu0 0.0
        %361 = vmatpush1.msra.mxu0 0.0
        %362 = vmatprep.subr.mxu0 0.0
        %363 = vmatpush1.msra.mxu0 0.0
        %364 = vmatprep.subr.mxu0 0.0
        %365 = vmatpush1.msra.mxu0 0.0
        %366 = vmatprep.subr.mxu0 0.0
        %367 = vmatpush1.msra.mxu0 0.0
        %368 = vmatprep.subr.mxu0 0.0
        %369 = vmatpush1.msra.mxu0 0.0
        %370 = vmatprep.subr.mxu0 0.0
        %371 = vmatpush1.msra.mxu0 0.0
        %372 = vmatprep.subr.mxu0 0.0
        %373 = vmatpush1.msra.mxu0 0.0
        %374 = vmatprep.subr.mxu0 0.0
        %375 = vmatpush1.msra.mxu0 0.0
        %376 = vmatprep.subr.mxu0 0.0
        %377 = vmatpush1.msra.mxu0 0.0
        %378 = vmatprep.subr.mxu0 0.0
        %379 = vmatpush1.msra.mxu0 0.0
        %380 = vmatprep.subr.mxu0 0.0
        %381 = vmatpush1.msra.mxu0 0.0
        %382 = vmatprep.subr.mxu0 0.0
        %383 = vmatpush1.msra.mxu0 0.0
        %384 = vmatprep.mubr.f32.mxu0 0.0
        %385 = vmatmul.mubr.f32.gmra.mrb[0].mxu0 %v318
        %v386 = vpop.f32.mrb[0].mxu0
        %v387 = vadd.f32 %v305, %v386
        %v388 = vpop.f32.mrb[0].mxu0
        %389 = vdwg.mxu0
        %v390 = vmul.f32 %v387, 0.5
        %v391 = vtanh.pop %v390
        %v392 = vadd.f32 %v391, 1.0
        %v393 = vmul.f32 %v392, 0.5
        %v394 = vtanh.pop %v387
        %395 = vrot.lane.b32.xlu0 %v310, 96
        %v396 = vpop.permute.xlu0 %395
        %v398 = vmul.f32 %v393, %v396
        %400 = vrot.lane.b32.xlu0 %v394, 64
        %v401 = vpop.permute.xlu0 %400
        %v403 = vmul.f32 %v393, %v401
        %405 = vrot.lane.b32.xlu0 %v403, 32
        %v406 = vpop.permute.xlu0 %405
        %v408 = vadd.f32 %v398, %v406
        %v409 = vtanh.pop %v408
        %411 = vrot.lane.b32.xlu0 %v409, 64
        %v412 = vpop.permute.xlu0 %411
        %v414 = vmul.f32 %v393, %v412
        %v415 = vld [vmem:[#allocation8 + $0x60] sm:$0xff]
        %v416 = vld [vmem:[#allocation8 + $0x68] sm:$0xff]
        %v417 = vld [vmem:[#allocation8 + $0x70] sm:$0xff]
        %v418 = vld [vmem:[#allocation8 + $0x78] sm:$0xff]
        %v419 = vld [vmem:[#allocation8 + $0x80] sm:$0xff]
        %v420 = vld [vmem:[#allocation8 + $0x88] sm:$0xff]
        %v421 = vld [vmem:[#allocation8 + $0x90] sm:$0xff]
        %v422 = vld [vmem:[#allocation8 + $0x98] sm:$0xff]
        %v423 = vld [vmem:[#allocation8 + $0xa1] sm:$0x1]
        %425 = vrot.lane.b32.xlu0 %v414, 32
        %v426 = vpop.permute.xlu0 %425
        %vm428 = vcmask 261120
        %v429 = vsel %vm428, %v426, %v291
        %v431 = vsel %vm314, %v429, 0
        %433 = vmatprep.subr.mxu0 0.0
        %434 = vmatpush1.msra.mxu0 %v415
        %435 = vmatprep.subr.mxu0 0.0
        %436 = vmatpush1.msra.mxu0 %v416
        %437 = vmatprep.subr.mxu0 0.0
        %438 = vmatpush1.msra.mxu0 %v417
        %439 = vmatprep.subr.mxu0 0.0
        %440 = vmatpush1.msra.mxu0 %v418
        %441 = vmatprep.subr.mxu0 0.0
        %442 = vmatpush1.msra.mxu0 %v419
        %443 = vmatprep.subr.mxu0 0.0
        %444 = vmatpush1.msra.mxu0 %v420
        %445 = vmatprep.subr.mxu0 0.0
        %446 = vmatpush1.msra.mxu0 %v421
        %447 = vmatprep.subr.mxu0 0.0
        %448 = vmatpush1.msra.mxu0 %v422
        %449 = vmatprep.subr.mxu0 0.0
        %450 = vmatpush1.msra.mxu0 0.0
        %451 = vmatprep.subr.mxu0 0.0
        %452 = vmatpush1.msra.mxu0 0.0
        %453 = vmatprep.subr.mxu0 0.0
        %454 = vmatpush1.msra.mxu0 0.0
        %455 = vmatprep.subr.mxu0 0.0
        %456 = vmatpush1.msra.mxu0 0.0
        %457 = vmatprep.subr.mxu0 0.0
        %458 = vmatpush1.msra.mxu0 0.0
        %459 = vmatprep.subr.mxu0 0.0
        %460 = vmatpush1.msra.mxu0 0.0
        %461 = vmatprep.subr.mxu0 0.0
        %462 = vmatpush1.msra.mxu0 0.0
        %463 = vmatprep.subr.mxu0 0.0
        %464 = vmatpush1.msra.mxu0 0.0
        %465 = vmatprep.subr.mxu0 0.0
        %466 = vmatpush1.msra.mxu0 0.0
        %467 = vmatprep.subr.mxu0 0.0
        %468 = vmatpush1.msra.mxu0 0.0
        %469 = vmatprep.subr.mxu0 0.0
        %470 = vmatpush1.msra.mxu0 0.0
        %471 = vmatprep.subr.mxu0 0.0
        %472 = vmatpush1.msra.mxu0 0.0
        %473 = vmatprep.subr.mxu0 0.0
        %474 = vmatpush1.msra.mxu0 0.0
        %475 = vmatprep.subr.mxu0 0.0
        %476 = vmatpush1.msra.mxu0 0.0
        %477 = vmatprep.subr.mxu0 0.0
        %478 = vmatpush1.msra.mxu0 0.0
        %479 = vmatprep.subr.mxu0 0.0
        %480 = vmatpush1.msra.mxu0 0.0
        %481 = vmatprep.subr.mxu0 0.0
        %482 = vmatpush1.msra.mxu0 0.0
        %483 = vmatprep.subr.mxu0 0.0
        %484 = vmatpush1.msra.mxu0 0.0
        %485 = vmatprep.subr.mxu0 0.0
        %486 = vmatpush1.msra.mxu0 0.0
        %487 = vmatprep.subr.mxu0 0.0
        %488 = vmatpush1.msra.mxu0 0.0
        %489 = vmatprep.subr.mxu0 0.0
        %490 = vmatpush1.msra.mxu0 0.0
        %491 = vmatprep.subr.mxu0 0.0
        %492 = vmatpush1.msra.mxu0 0.0
        %493 = vmatprep.subr.mxu0 0.0
        %494 = vmatpush1.msra.mxu0 0.0
        %495 = vmatprep.subr.mxu0 0.0
        %496 = vmatpush1.msra.mxu0 0.0
        %497 = vmatprep.mubr.f32.mxu0 0.0
        %498 = vmatmul.mubr.f32.gmra.mrb[0].mxu0 %v431
        %v499 = vpop.f32.mrb[0].mxu0
        %v500 = vadd.f32 %v423, %v499
        %v501 = vpop.f32.mrb[0].mxu0
        %502 = vdwg.mxu0
        %v503 = vmul.f32 %v500, 0.5
        %v504 = vtanh.pop %v503
        %v505 = vadd.f32 %v504, 1.0
        %v506 = vmul.f32 %v505, 0.5
        %v507 = vtanh.pop %v500
        %v508 = vmul.f32 %v506, %v312
        %510 = vrot.lane.b32.xlu0 %v507, 64
        %v511 = vpop.permute.xlu0 %510
        %v513 = vmul.f32 %v506, %v511
        %515 = vrot.lane.b32.xlu0 %v513, 32
        %v516 = vpop.permute.xlu0 %515
        %v518 = vadd.f32 %v508, %v516
        %v519 = vtanh.pop %v518
        %521 = vrot.lane.b32.xlu0 %v519, 64
        %v522 = vpop.permute.xlu0 %521
        %v524 = vmul.f32 %v506, %v522
        %526 = vrot.lane.b32.xlu0 %v524, 64
        %v527 = vpop.permute.xlu0 %526
        %530 = vrot.lane.b32.xlu0 %v408, 32
        %v531 = vpop.permute.xlu0 %530
        %534 = vrot.lane.b32.xlu0 %v518, 64
        %v535 = vpop.permute.xlu0 %534
        %v537 = vsel %vm428, %v426, %v527
        %v538 = vsel %vm314, %v537, %v531
        %v539 = vsel %vm316, %v538, %v535
        %540 = vst [vmem:[#allocation2] sm:$0x1] %v539
        %541 = vrot.lane.b32.xlu0 %v524, 32
        %v542 = vpop.permute.xlu0 %541
        %vm544 = vcmask 253952
        %545 = vst.msk [vmem:[%s278] sm:$0x1] %vm544, %v542
        %p546 = scmp.eq.s32.totalorder %s33, 7
        // Predicated region
        $region49: #{tpu_custom_call.1} parent=31 // pred_check
          %p547 = pneg %p546
        $region50: #{tpu_custom_call.1} parent=31 // pred_check_branch
          %549 = sbr.rel (%p547) target = $region52
        $region51: #{tpu_custom_call.1} parent=31 // pred_region
          %550 = vst [vmem:[%s284] sm:$0x1] %v539
        $region52: #{tpu_custom_call.1} parent=31 // pred_fallthru
          _
        %s551 = sand.u32 %s125, 1
        %s552 = scalar_lea.sflag [#allocation5], %s551
        %s553 = sand.u32 %s125, 1
        %s554 = scalar_lea.vmem [#allocation9], %s553
        %s555 = sand.u32 %s151, 1
        %s556 = scalar_lea.sflag [#allocation11], %s555
        %s557 = sand.u32 %s151, 1
        %s558 = scalar_lea.vmem [#allocation10], %s557
        // Predicated region
        $region53: #{tpu_custom_call.1} parent=31 // pred_check
          %p559 = pneg %p135
        $region54: #{tpu_custom_call.1} parent=31 // pred_check_branch
          %561 = sbr.rel (%p559) target = $region56
        $region55: #{tpu_custom_call.1} parent=31 // pred_region
          %s563 = ssub.s32 16, 16
          %564 = vsyncadd %s552, %s563
          %s565 = smul.addr %s32, 8
          %s566 = sadd.s32 %s33, %s565
          %s567 = smul.addr %s566, 16
          %s568 = scalar_lea.hbm %s3, %s567
          %s570 = sshll.u32 %s554, 4
          %s571 = int_to_ptr.vmem [resolvable:$true] %s570
          %573 = dma.vmem_to_hbm [thread:$0]  %s571, 16, %s568, %s552
        $region56: #{tpu_custom_call.1} parent=31 // pred_fallthru
          _
        // Predicated region
        $region57: #{tpu_custom_call.1} parent=31 // pred_check
          %p574 = pneg %p161
        $region58: #{tpu_custom_call.1} parent=31 // pred_check_branch
          %576 = sbr.rel (%p574) target = $region60
        $region59: #{tpu_custom_call.1} parent=31 // pred_region
          %s578 = ssub.s32 16, 16
          %579 = vsyncadd %s556, %s578
          %s580 = smul.addr %s32, 16
          %s581 = scalar_lea.hbm %s4, %s580
          %s583 = sshll.u32 %s558, 4
          %s584 = int_to_ptr.vmem [resolvable:$true] %s583
          %586 = dma.vmem_to_hbm [thread:$0]  %s584, 16, %s581, %s556
        $region60: #{tpu_custom_call.1} parent=31 // pred_fallthru
          _
      $region32: #{tpu_custom_call.1} parent=5 // pred_fallthru
        _
      %p587 = scmp.le.s32.totalorder 2, %s23
      // Predicated region
      $region61: #{tpu_custom_call.1} parent=5 // pred_check
        %p588 = pneg %p587
      $region62: #{tpu_custom_call.1} parent=5 // pred_check_branch
        %590 = sbr.rel (%p588) target = $region64
      $region63: #{tpu_custom_call.1} parent=5 // pred_region
        %s591 = ssub.s32 %s23, 2
        // Predicated region
        $region65: #{tpu_custom_call.1} parent=63 // pred_check
          %p592 = pneg %p141
        $region66: #{tpu_custom_call.1} parent=63 // pred_check_branch
          %594 = sbr.rel (%p592) target = $region68
        $region67: #{tpu_custom_call.1} parent=63 // pred_region
          %s595 = sand.u32 %s126, 1
          %s596 = scalar_lea.sflag [#allocation5], %s595
          %s597 = sand.u32 %s126, 1
          %s598 = scalar_lea.vmem [#allocation9], %s597
          %599 = dma.done %s596, 16
        $region68: #{tpu_custom_call.1} parent=63 // pred_fallthru
          _
        // Predicated region
        $region69: #{tpu_custom_call.1} parent=63 // pred_check
          %p600 = pneg %p167
        $region70: #{tpu_custom_call.1} parent=63 // pred_check_branch
          %602 = sbr.rel (%p600) target = $region72
        $region71: #{tpu_custom_call.1} parent=63 // pred_region
          %s603 = sand.u32 %s152, 1
          %s604 = scalar_lea.sflag [#allocation11], %s603
          %s605 = sand.u32 %s152, 1
          %s606 = scalar_lea.vmem [#allocation10], %s605
          %607 = dma.done %s604, 16
        $region72: #{tpu_custom_call.1} parent=63 // pred_fallthru
          _
      $region64: #{tpu_custom_call.1} parent=5 // pred_fallthru
        _
    $region6: #{tpu_custom_call.1} parent=1 // loop_footer
      %s27 = sadd.s32 1, %s23
    $region7: #{tpu_custom_call.1} parent=1 // loop_footer_branch
      %22 = sbr.rel target = $region3
    $region8: #{tpu_custom_call.1} parent=1 // loop_exit
      _
    %608 = vsyncpa [#allocation4], 1
    %s609 = scalar_lea.sflag [#allocation4], 1
    %610 = vsyncpa %s609, 1
    %611 = vsyncpa [#allocation7], 1
    %s612 = scalar_lea.sflag [#allocation7], 1
    %613 = vsyncpa %s612, 1
    %614 = vsyncpa [#allocation5], 1
    %s615 = scalar_lea.sflag [#allocation5], 1
    %616 = vsyncpa %s615, 1
    %617 = vsyncpa [#allocation11], 1
    %s618 = scalar_lea.sflag [#allocation11], 1
    %619 = vsyncpa %s618, 1

</llo_original>
